<compile_context>
chip_gen: v7x
topology: tpu7x:2x2x1
jax: 0.10.0
libtpu: 0.0.40
codegen_flags: <defaults>
</compile_context>

<pallas_src>
import numpy as np
import jax
import jax.numpy as jnp
from jax.experimental import pallas as pl
from jax.experimental.pallas import tpu as pltpu


def _round_up(x, m):
    return (x + m - 1) // m * m


def _gcn_norm_adj(edge_index, num_nodes):
    """Dense D^{-1/2}(A+I)D^{-1/2}, matching torch_geometric GCNConv's gcn_norm.

    edge_index[0] = source j, edge_index[1] = target i (messages j -> i);
    degree is the in-degree (incl. self loop) of each node.
    """
    src = np.asarray(edge_index[0], dtype=np.int64)
    dst = np.asarray(edge_index[1], dtype=np.int64)
    loop = np.arange(num_nodes, dtype=np.int64)
    src = np.concatenate([src, loop])
    dst = np.concatenate([dst, loop])
    deg = np.zeros(num_nodes, dtype=np.float64)
    np.add.at(deg, dst, 1.0)
    dinv = np.where(deg > 0, deg ** -0.5, 0.0)
    norm = dinv[src] * dinv[dst]
    a = np.zeros((num_nodes, num_nodes), dtype=np.float64)
    np.add.at(a, (dst, src), norm)          # A_hat[i, j] for edge j -> i
    return a.astype(np.float32)


def _bugcn_kernel(a_ref, x_ref, w1_ref, b1_ref, w2_ref, b2_ref, out_ref):
    """Fused two-layer GCN: relu(A @ (relu(A @ (X W1) + b1) @ W2) + b2)."""
    xw1 = jnp.dot(x_ref[...], w1_ref[...], preferred_element_type=jnp.float32)
    # Read a_ref at each use (not bound across layers) to keep live ranges short.
    h1 = jnp.maximum(
        jnp.dot(a_ref[...], xw1, preferred_element_type=jnp.float32) + b1_ref[...],
        0.0)
    # F.dropout with training=False is the identity at inference time.
    xw2 = jnp.dot(h1, w2_ref[...], preferred_element_type=jnp.float32)
    h2 = jnp.dot(a_ref[...], xw2, preferred_element_type=jnp.float32) + b2_ref[...]
    out_ref[...] = jnp.maximum(h2, 0.0)


def make_bugcn_forward(edge_index, num_nodes, w1, b1, w2, b2):
    """Build a jitted forward(x) for a fixed graph + fixed weights.

    All graph-dependent host work (dense A_hat build) and all static padding
    happen ONCE here; the returned callable only pads x, launches the fused
    kernel and slices the padding off, all inside one jax.jit.
    """
    N = int(num_nodes)
    din, dhid = int(w1.shape[0]), int(w1.shape[1])
    dout = int(w2.shape[1])

    # Lane/sublane-friendly padding: 128 on every matmul dim.
    Np = _round_up(N, 128)
    dinp = _round_up(din, 128)
    dhidp = _round_up(dhid, 128)
    doutp = _round_up(dout, 128)

    # --- one-time host work + host->device copies (cached as device arrays) ---
    a_hat = _gcn_norm_adj(np.asarray(edge_index), N)            # (N, N) numpy glue
    a_np = np.zeros((Np, Np), np.float32)
    a_np[:N, :N] = a_hat
    a_p = jnp.asarray(a_np)

    w1_np = np.zeros((dinp, dhidp), np.float32)
    w1_np[:din, :dhid] = np.asarray(w1, np.float32)
    b1_np = np.zeros((1, dhidp), np.float32)
    b1_np[0, :dhid] = np.asarray(b1, np.float32)
    w2_np = np.zeros((dhidp, doutp), np.float32)
    w2_np[:dhid, :dout] = np.asarray(w2, np.float32)
    b2_np = np.zeros((1, doutp), np.float32)
    b2_np[0, :dout] = np.asarray(b2, np.float32)
    w1_p, b1_p = jnp.asarray(w1_np), jnp.asarray(b1_np)
    w2_p, b2_p = jnp.asarray(w2_np), jnp.asarray(b2_np)

    kernel_call = pl.pallas_call(
        _bugcn_kernel,
        out_shape=jax.ShapeDtypeStruct((Np, doutp), jnp.float32),
        grid_spec=pltpu.PrefetchScalarGridSpec(
            num_scalar_prefetch=0,
            grid=(1,),                                          # single fused step
            in_specs=[
                pl.BlockSpec((Np, Np), lambda i: (0, 0)),       # A_hat
                pl.BlockSpec((Np, dinp), lambda i: (0, 0)),     # X
                pl.BlockSpec((dinp, dhidp), lambda i: (0, 0)),  # W1
                pl.BlockSpec((1, dhidp), lambda i: (0, 0)),     # b1
                pl.BlockSpec((dhidp, doutp), lambda i: (0, 0)), # W2
                pl.BlockSpec((1, doutp), lambda i: (0, 0)),     # b2
            ],
            out_specs=pl.BlockSpec((Np, doutp), lambda i: (0, 0)),
        ),
        compiler_params=pltpu.CompilerParams(
            dimension_semantics=("arbitrary",)),
    )

    @jax.jit
    def forward(x):
        x_p = jnp.zeros((Np, dinp), jnp.float32).at[:N, :din].set(
            x.astype(jnp.float32))
        out_p = kernel_call(a_p, x_p, w1_p, b1_p, w2_p, b2_p)
        return out_p[:N, :dout]

    return forward


def ref_forward(x, edge_index, w1, b1, w2, b2):
    """Pure-JAX reference replicating the PyTorch BUGCN forward (eval mode)."""
    N = x.shape[0]
    a_hat = jnp.asarray(_gcn_norm_adj(np.asarray(edge_index), N))
    h = jnp.maximum(a_hat @ (x @ w1) + b1, 0.0)
    return jnp.maximum(a_hat @ (h @ w2) + b2, 0.0)


if __name__ == "__main__":
    # args.in_dim=32, args.hid_dim=64, args.out_dim=32; N=100 graph nodes, E=200 edges.
    N, in_dim, hid_dim, out_dim, E = 100, 32, 64, 32, 200

    key = jax.random.PRNGKey(0)
    kx, ke, ko, k1, kb1, k2, kb2 = jax.random.split(key, 7)

    x = jax.random.normal(kx, (N, in_dim), dtype=jnp.float32)

    # Random directed edges (child -> parent style, no self loops).
    src = np.asarray(jax.random.randint(ke, (E,), 0, N))
    off = np.asarray(jax.random.randint(ko, (E,), 1, N))
    dst = (src + off) % N
    edge_index = np.stack([src, dst], axis=0).astype(np.int32)    # BU_edge_index

    w1 = jax.random.normal(k1, (in_dim, hid_dim), jnp.float32) / np.sqrt(in_dim)
    b1 = jax.random.normal(kb1, (hid_dim,), jnp.float32) * 0.01
    w2 = jax.random.normal(k2, (hid_dim, out_dim), jnp.float32) / np.sqrt(hid_dim)
    b2 = jax.random.normal(kb2, (out_dim,), jnp.float32) * 0.01

    # One-time setup (A_hat build + weight padding), then cheap per-call path.
    bugcn_forward = make_bugcn_forward(edge_index, N, w1, b1, w2, b2)

    out = jax.block_until_ready(bugcn_forward(x))
    # Second call exercises the cached/jitted fast path (no host-side rebuild).
    out = jax.block_until_ready(bugcn_forward(x))
    ref = jax.block_until_ready(ref_forward(x, edge_index, w1, b1, w2, b2))

    assert out.shape == (N, out_dim), out.shape
    np.testing.assert_allclose(np.asarray(out), np.asarray(ref), rtol=1e-4, atol=1e-4)
    print("KERNEL_OK")
</pallas_src>

<mosaic_0001>
module attributes {stable_mosaic.version = 11 : i64} {
  func.func @_bugcn_kernel(%arg0: i32, %arg1: memref<128x128xf32, #tpu.memory_space<vmem>>, %arg2: memref<128x128xf32, #tpu.memory_space<vmem>>, %arg3: memref<128x128xf32, #tpu.memory_space<vmem>>, %arg4: memref<1x128xf32, #tpu.memory_space<vmem>>, %arg5: memref<128x128xf32, #tpu.memory_space<vmem>>, %arg6: memref<1x128xf32, #tpu.memory_space<vmem>>, %arg7: memref<128x128xf32, #tpu.memory_space<vmem>>) attributes {dimension_semantics = [#tpu.dimension_semantics<arbitrary>], iteration_bounds = array<i64: 1>, scalar_prefetch = 0 : i64, scratch_operands = 0 : i64, tpu.core_type = #tpu.core_type<tc>, window_params = [{pipeline_mode = #tpu.pipeline_mode<synchronous>, transform_indices = @transform_0, window_bounds = array<i64: 128, 128>}, {pipeline_mode = #tpu.pipeline_mode<synchronous>, transform_indices = @transform_1, window_bounds = array<i64: 128, 128>}, {pipeline_mode = #tpu.pipeline_mode<synchronous>, transform_indices = @transform_2, window_bounds = array<i64: 128, 128>}, {pipeline_mode = #tpu.pipeline_mode<synchronous>, transform_indices = @transform_3, window_bounds = array<i64: 1, 128>}, {pipeline_mode = #tpu.pipeline_mode<synchronous>, transform_indices = @transform_4, window_bounds = array<i64: 128, 128>}, {pipeline_mode = #tpu.pipeline_mode<synchronous>, transform_indices = @transform_5, window_bounds = array<i64: 1, 128>}, {pipeline_mode = #tpu.pipeline_mode<synchronous>, transform_indices = @transform_6, window_bounds = array<i64: 128, 128>}]} {
    %c0 = arith.constant 0 : index
    %c0_0 = arith.constant 0 : index
    %0 = vector.load %arg2[%c0, %c0_0] : memref<128x128xf32, #tpu.memory_space<vmem>>, vector<128x128xf32>
    %c0_1 = arith.constant 0 : index
    %c0_2 = arith.constant 0 : index
    %1 = vector.load %arg3[%c0_1, %c0_2] : memref<128x128xf32, #tpu.memory_space<vmem>>, vector<128x128xf32>
    %cst = arith.constant dense<0.000000e+00> : vector<128x128xf32>
    %2 = tpu.matmul %0, %1, %cst {dimension_numbers = #tpu.dot_dimension_numbers<[1], [0], [0], [1], [0, 0, 1, 1], [], []>} : vector<128x128xf32>, vector<128x128xf32>, vector<128x128xf32> -> vector<128x128xf32>
    %c0_3 = arith.constant 0 : index
    %c0_4 = arith.constant 0 : index
    %3 = vector.load %arg1[%c0_3, %c0_4] : memref<128x128xf32, #tpu.memory_space<vmem>>, vector<128x128xf32>
    %cst_5 = arith.constant dense<0.000000e+00> : vector<128x128xf32>
    %4 = tpu.matmul %3, %2, %cst_5 {dimension_numbers = #tpu.dot_dimension_numbers<[1], [0], [0], [1], [0, 0, 1, 1], [], []>} : vector<128x128xf32>, vector<128x128xf32>, vector<128x128xf32> -> vector<128x128xf32>
    %c0_6 = arith.constant 0 : index
    %c0_7 = arith.constant 0 : index
    %5 = vector.load %arg4[%c0_6, %c0_7] : memref<1x128xf32, #tpu.memory_space<vmem>>, vector<1x128xf32>
    %6 = vector.broadcast %5 : vector<1x128xf32> to vector<128x128xf32>
    %7 = arith.addf %4, %6 : vector<128x128xf32>
    %cst_8 = arith.constant 0.000000e+00 : f32
    %8 = vector.broadcast %cst_8 : f32 to vector<128x128xf32>
    %9 = arith.maximumf %7, %8 : vector<128x128xf32>
    %c0_9 = arith.constant 0 : index
    %c0_10 = arith.constant 0 : index
    %10 = vector.load %arg5[%c0_9, %c0_10] : memref<128x128xf32, #tpu.memory_space<vmem>>, vector<128x128xf32>
    %cst_11 = arith.constant dense<0.000000e+00> : vector<128x128xf32>
    %11 = tpu.matmul %9, %10, %cst_11 {dimension_numbers = #tpu.dot_dimension_numbers<[1], [0], [0], [1], [0, 0, 1, 1], [], []>} : vector<128x128xf32>, vector<128x128xf32>, vector<128x128xf32> -> vector<128x128xf32>
    %c0_12 = arith.constant 0 : index
    %c0_13 = arith.constant 0 : index
    %12 = vector.load %arg1[%c0_12, %c0_13] : memref<128x128xf32, #tpu.memory_space<vmem>>, vector<128x128xf32>
    %cst_14 = arith.constant dense<0.000000e+00> : vector<128x128xf32>
    %13 = tpu.matmul %12, %11, %cst_14 {dimension_numbers = #tpu.dot_dimension_numbers<[1], [0], [0], [1], [0, 0, 1, 1], [], []>} : vector<128x128xf32>, vector<128x128xf32>, vector<128x128xf32> -> vector<128x128xf32>
    %c0_15 = arith.constant 0 : index
    %c0_16 = arith.constant 0 : index
    %14 = vector.load %arg6[%c0_15, %c0_16] : memref<1x128xf32, #tpu.memory_space<vmem>>, vector<1x128xf32>
    %15 = vector.broadcast %14 : vector<1x128xf32> to vector<128x128xf32>
    %16 = arith.addf %13, %15 : vector<128x128xf32>
    %cst_17 = arith.constant 0.000000e+00 : f32
    %17 = vector.broadcast %cst_17 : f32 to vector<128x128xf32>
    %18 = arith.maximumf %16, %17 : vector<128x128xf32>
    %c0_18 = arith.constant 0 : index
    %c0_19 = arith.constant 0 : index
    %19 = vector.load %arg7[%c0_18, %c0_19] : memref<128x128xf32, #tpu.memory_space<vmem>>, vector<128x128xf32>
    tpu.vector_store %arg7[%c0_18, %c0_19], %18 {strides = array<i32>} : memref<128x128xf32, #tpu.memory_space<vmem>>, vector<128x128xf32>,
    return
  }
  func.func @transform_0(%arg0: i32) -> (i32, i32) {
    %c0_i32 = arith.constant 0 : i32
    %c0_i32_0 = arith.constant 0 : i32
    %c0_i32_1 = arith.constant 0 : i32
    return %c0_i32, %c0_i32_0 : i32, i32
  }
  func.func @transform_1(%arg0: i32) -> (i32, i32) {
    %c0_i32 = arith.constant 0 : i32
    %c0_i32_0 = arith.constant 0 : i32
    %c0_i32_1 = arith.constant 0 : i32
    return %c0_i32, %c0_i32_0 : i32, i32
  }
  func.func @transform_2(%arg0: i32) -> (i32, i32) {
    %c0_i32 = arith.constant 0 : i32
    %c0_i32_0 = arith.constant 0 : i32
    %c0_i32_1 = arith.constant 0 : i32
    return %c0_i32, %c0_i32_0 : i32, i32
  }
  func.func @transform_3(%arg0: i32) -> (i32, i32) {
    %c0_i32 = arith.constant 0 : i32
    %c0_i32_0 = arith.constant 0 : i32
    %c0_i32_1 = arith.constant 0 : i32
    return %c0_i32, %c0_i32_0 : i32, i32
  }
  func.func @transform_4(%arg0: i32) -> (i32, i32) {
    %c0_i32 = arith.constant 0 : i32
    %c0_i32_0 = arith.constant 0 : i32
    %c0_i32_1 = arith.constant 0 : i32
    return %c0_i32, %c0_i32_0 : i32, i32
  }
  func.func @transform_5(%arg0: i32) -> (i32, i32) {
    %c0_i32 = arith.constant 0 : i32
    %c0_i32_0 = arith.constant 0 : i32
    %c0_i32_1 = arith.constant 0 : i32
    return %c0_i32, %c0_i32_0 : i32, i32
  }
  func.func @transform_6(%arg0: i32) -> (i32, i32) {
    %c0_i32 = arith.constant 0 : i32
    %c0_i32_0 = arith.constant 0 : i32
    %c0_i32_1 = arith.constant 0 : i32
    return %c0_i32, %c0_i32_0 : i32, i32
  }
}

</mosaic_0001>

<llo_original>
// kernel: forward.1
$region0: #{forward.1}
  #allocation0 [shape = 'u32[]', space=smem, size = 0x4, offset = 0x4, fixed_abs, tag = 'smem constant byte address 0x4 - core index']
  #allocation1 [shape = 'u32[144,128]{1,0:T(1,128)}', space=vmem, size = 0x12000, scoped, tag = 'internal scratch']
  %s0 = inlined_call_operand.hbm [shape: f32[128,128], index: 0, kind: input, shape index: {}]
  %s1 = inlined_call_operand.vmem [shape: f32[128,128], index: 1, kind: input, shape index: {}]
  %s2 = inlined_call_operand.vmem [shape: f32[128,128], index: 2, kind: input, shape index: {}]
  %s3 = inlined_call_operand.vmem [shape: f32[1,128], index: 3, kind: input, shape index: {}]
  %s4 = inlined_call_operand.vmem [shape: f32[128,128], index: 4, kind: input, shape index: {}]
  %s5 = inlined_call_operand.vmem [shape: f32[1,128], index: 5, kind: input, shape index: {}]
  %s6 = inlined_call_operand.vmem [shape: f32[128,128], index: 6, kind: output, shape index: {}]
  %s7 = sld [smem:[#allocation0]]
  $region38: #{forward.1} parent=0
    _
  %s9 = ssub.s32 1, %s7
  %s10 = scalar_select 0, %s9, %s7
  $region1: #{forward.1} parent=0
    #allocation2 [shape = 'u8[65536]{0}', space=vmem, size = 0x10000, scoped, tag = 'input window, operand 0, single buffered']
    #allocation3 [shape = 's32[1]{0}', space=sflag, size = 0x4, scoped, tag = 'scoped memory for forward.1']
    %11 = vsyncpa [#allocation3], 0
    // Predicated region
    $region2: #{forward.1} parent=1 // pred_check
      _
    $region3: #{forward.1} parent=1 // pred_check_branch
      %13 = sbr.rel (0) target = $region5
    $region4: #{forward.1} parent=1 // pred_region
      %s15 = ssub.s32 2048, 2048
      %16 = vsyncadd [#allocation3], %s15
      %s17 = sshll.u32 [#allocation2], 4
      %s18 = int_to_ptr.vmem [resolvable:$true] %s17
      %23 = dma.hbm_to_vmem [thread:$0]  %s0, 2048, %s18, [#allocation3], 128, 128, 8
    $region5: #{forward.1} parent=1 // pred_fallthru
      _
    // Predicated region
    $region6: #{forward.1} parent=1 // pred_check
      _
    $region7: #{forward.1} parent=1 // pred_check_branch
      %25 = sbr.rel (0) target = $region9
    $region8: #{forward.1} parent=1 // pred_region
      _
    $region9: #{forward.1} parent=1 // pred_fallthru
      _
    // Predicated region
    $region10: #{forward.1} parent=1 // pred_check
      _
    $region11: #{forward.1} parent=1 // pred_check_branch
      %27 = sbr.rel (0) target = $region13
    $region12: #{forward.1} parent=1 // pred_region
      _
    $region13: #{forward.1} parent=1 // pred_fallthru
      _
    // Predicated region
    $region14: #{forward.1} parent=1 // pred_check
      _
    $region15: #{forward.1} parent=1 // pred_check_branch
      %29 = sbr.rel (0) target = $region17
    $region16: #{forward.1} parent=1 // pred_region
      _
    $region17: #{forward.1} parent=1 // pred_fallthru
      _
    // Predicated region
    $region18: #{forward.1} parent=1 // pred_check
      _
    $region19: #{forward.1} parent=1 // pred_check_branch
      %31 = sbr.rel (0) target = $region21
    $region20: #{forward.1} parent=1 // pred_region
      _
    $region21: #{forward.1} parent=1 // pred_fallthru
      _
    // Predicated region
    $region22: #{forward.1} parent=1 // pred_check
      _
    $region23: #{forward.1} parent=1 // pred_check_branch
      %33 = sbr.rel (0) target = $region25
    $region24: #{forward.1} parent=1 // pred_region
      _
    $region25: #{forward.1} parent=1 // pred_fallthru
      _
    // Predicated region
    $region26: #{forward.1} parent=1 // pred_check
      _
    $region27: #{forward.1} parent=1 // pred_check_branch
      %35 = sbr.rel (0) target = $region29
    $region28: #{forward.1} parent=1 // pred_region
      %36 = dma.done [#allocation3], 2048
    $region29: #{forward.1} parent=1 // pred_fallthru
      _
    %v37 = vld [vmem:[%s1] sm:$0xff]
    %v38 = vld [vmem:[%s1 + $0x8] sm:$0xff]
    %v39 = vld [vmem:[%s1 + $0x10] sm:$0xff]
    %v40 = vld [vmem:[%s1 + $0x18] sm:$0xff]
    %v41 = vld [vmem:[%s1 + $0x20] sm:$0xff]
    %v42 = vld [vmem:[%s1 + $0x28] sm:$0xff]
    %v43 = vld [vmem:[%s1 + $0x30] sm:$0xff]
    %v44 = vld [vmem:[%s1 + $0x38] sm:$0xff]
    %v45 = vld [vmem:[%s1 + $0x40] sm:$0xff]
    %v46 = vld [vmem:[%s1 + $0x48] sm:$0xff]
    %v47 = vld [vmem:[%s1 + $0x50] sm:$0xff]
    %v48 = vld [vmem:[%s1 + $0x58] sm:$0xff]
    %v49 = vld [vmem:[%s1 + $0x60] sm:$0xff]
    %v50 = vld [vmem:[%s1 + $0x68] sm:$0xff]
    %v51 = vld [vmem:[%s1 + $0x70] sm:$0xff]
    %v52 = vld [vmem:[%s1 + $0x78] sm:$0xff]
    %v53 = vld [vmem:[%s2] sm:$0xff]
    %v54 = vld [vmem:[%s2 + $0x8] sm:$0xff]
    %v55 = vld [vmem:[%s2 + $0x10] sm:$0xff]
    %v56 = vld [vmem:[%s2 + $0x18] sm:$0xff]
    %v57 = vld [vmem:[%s2 + $0x20] sm:$0xff]
    %v58 = vld [vmem:[%s2 + $0x28] sm:$0xff]
    %v59 = vld [vmem:[%s2 + $0x30] sm:$0xff]
    %v60 = vld [vmem:[%s2 + $0x38] sm:$0xff]
    %v61 = vld [vmem:[%s2 + $0x40] sm:$0xff]
    %v62 = vld [vmem:[%s2 + $0x48] sm:$0xff]
    %v63 = vld [vmem:[%s2 + $0x50] sm:$0xff]
    %v64 = vld [vmem:[%s2 + $0x58] sm:$0xff]
    %v65 = vld [vmem:[%s2 + $0x60] sm:$0xff]
    %v66 = vld [vmem:[%s2 + $0x68] sm:$0xff]
    %v67 = vld [vmem:[%s2 + $0x70] sm:$0xff]
    %v68 = vld [vmem:[%s2 + $0x78] sm:$0xff]
    %69 = vmatprep.subr.mxu0 0.0
    %70 = vmatpush1.msra.mxu0 %v53
    %71 = vmatprep.subr.mxu0 0.0
    %72 = vmatpush1.msra.mxu0 %v54
    %73 = vmatprep.subr.mxu0 0.0
    %74 = vmatpush1.msra.mxu0 %v55
    %75 = vmatprep.subr.mxu0 0.0
    %76 = vmatpush1.msra.mxu0 %v56
    %77 = vmatprep.subr.mxu0 0.0
    %78 = vmatpush1.msra.mxu0 %v57
    %79 = vmatprep.subr.mxu0 0.0
    %80 = vmatpush1.msra.mxu0 %v58
    %81 = vmatprep.subr.mxu0 0.0
    %82 = vmatpush1.msra.mxu0 %v59
    %83 = vmatprep.subr.mxu0 0.0
    %84 = vmatpush1.msra.mxu0 %v60
    %85 = vmatprep.subr.mxu0 0.0
    %86 = vmatpush1.msra.mxu0 %v61
    %87 = vmatprep.subr.mxu0 0.0
    %88 = vmatpush1.msra.mxu0 %v62
    %89 = vmatprep.subr.mxu0 0.0
    %90 = vmatpush1.msra.mxu0 %v63
    %91 = vmatprep.subr.mxu0 0.0
    %92 = vmatpush1.msra.mxu0 %v64
    %93 = vmatprep.subr.mxu0 0.0
    %94 = vmatpush1.msra.mxu0 %v65
    %95 = vmatprep.subr.mxu0 0.0
    %96 = vmatpush1.msra.mxu0 %v66
    %97 = vmatprep.subr.mxu0 0.0
    %98 = vmatpush1.msra.mxu0 %v67
    %99 = vmatprep.subr.mxu0 0.0
    %100 = vmatpush1.msra.mxu0 %v68
    %101 = vmatprep.subr.mxu0 0.0
    %102 = vmatpush1.msra.mxu0 0.0
    %103 = vmatprep.subr.mxu0 0.0
    %104 = vmatpush1.msra.mxu0 0.0
    %105 = vmatprep.subr.mxu0 0.0
    %106 = vmatpush1.msra.mxu0 0.0
    %107 = vmatprep.subr.mxu0 0.0
    %108 = vmatpush1.msra.mxu0 0.0
    %109 = vmatprep.subr.mxu0 0.0
    %110 = vmatpush1.msra.mxu0 0.0
    %111 = vmatprep.subr.mxu0 0.0
    %112 = vmatpush1.msra.mxu0 0.0
    %113 = vmatprep.subr.mxu0 0.0
    %114 = vmatpush1.msra.mxu0 0.0
    %115 = vmatprep.subr.mxu0 0.0
    %116 = vmatpush1.msra.mxu0 0.0
    %117 = vmatprep.subr.mxu0 0.0
    %118 = vmatpush1.msra.mxu0 0.0
    %119 = vmatprep.subr.mxu0 0.0
    %120 = vmatpush1.msra.mxu0 0.0
    %121 = vmatprep.subr.mxu0 0.0
    %122 = vmatpush1.msra.mxu0 0.0
    %123 = vmatprep.subr.mxu0 0.0
    %124 = vmatpush1.msra.mxu0 0.0
    %125 = vmatprep.subr.mxu0 0.0
    %126 = vmatpush1.msra.mxu0 0.0
    %127 = vmatprep.subr.mxu0 0.0
    %128 = vmatpush1.msra.mxu0 0.0
    %129 = vmatprep.subr.mxu0 0.0
    %130 = vmatpush1.msra.mxu0 0.0
    %131 = vmatprep.subr.mxu0 0.0
    %132 = vmatpush1.msra.mxu0 0.0
    %133 = vmatprep.mubr.f32.mxu0 0.0
    %134 = vmatmul.mubr.f32.gmra.mrb[0].mxu0 %v37
    %v135 = vpop.f32.mrb[0].mxu0
    %v136 = vadd.f32 0.0, %v135
    %v137 = vpop.f32.mrb[0].mxu0
    %138 = vmatprep.mubr.f32.mxu0 0.0
    %139 = vmatmul.mubr.f32.gmra.mrb[0].mxu0 %v38
    %v140 = vpop.f32.mrb[0].mxu0
    %v141 = vadd.f32 0.0, %v140
    %v142 = vpop.f32.mrb[0].mxu0
    %143 = vmatprep.mubr.f32.mxu0 0.0
    %144 = vmatmul.mubr.f32.gmra.mrb[0].mxu0 %v39
    %v145 = vpop.f32.mrb[0].mxu0
    %v146 = vadd.f32 0.0, %v145
    %v147 = vpop.f32.mrb[0].mxu0
    %148 = vmatprep.mubr.f32.mxu0 0.0
    %149 = vmatmul.mubr.f32.gmra.mrb[0].mxu0 %v40
    %v150 = vpop.f32.mrb[0].mxu0
    %v151 = vadd.f32 0.0, %v150
    %v152 = vpop.f32.mrb[0].mxu0
    %153 = vmatprep.mubr.f32.mxu0 0.0
    %154 = vmatmul.mubr.f32.gmra.mrb[0].mxu0 %v41
    %v155 = vpop.f32.mrb[0].mxu0
    %v156 = vadd.f32 0.0, %v155
    %v157 = vpop.f32.mrb[0].mxu0
    %158 = vmatprep.mubr.f32.mxu0 0.0
    %159 = vmatmul.mubr.f32.gmra.mrb[0].mxu0 %v42
    %v160 = vpop.f32.mrb[0].mxu0
    %v161 = vadd.f32 0.0, %v160
    %v162 = vpop.f32.mrb[0].mxu0
    %163 = vmatprep.mubr.f32.mxu0 0.0
    %164 = vmatmul.mubr.f32.gmra.mrb[0].mxu0 %v43
    %v165 = vpop.f32.mrb[0].mxu0
    %v166 = vadd.f32 0.0, %v165
    %v167 = vpop.f32.mrb[0].mxu0
    %168 = vmatprep.mubr.f32.mxu0 0.0
    %169 = vmatmul.mubr.f32.gmra.mrb[0].mxu0 %v44
    %v170 = vpop.f32.mrb[0].mxu0
    %v171 = vadd.f32 0.0, %v170
    %v172 = vpop.f32.mrb[0].mxu0
    %173 = vmatprep.mubr.f32.mxu0 0.0
    %174 = vmatmul.mubr.f32.gmra.mrb[0].mxu0 %v45
    %v175 = vpop.f32.mrb[0].mxu0
    %v176 = vadd.f32 0.0, %v175
    %v177 = vpop.f32.mrb[0].mxu0
    %178 = vmatprep.mubr.f32.mxu0 0.0
    %179 = vmatmul.mubr.f32.gmra.mrb[0].mxu0 %v46
    %v180 = vpop.f32.mrb[0].mxu0
    %v181 = vadd.f32 0.0, %v180
    %v182 = vpop.f32.mrb[0].mxu0
    %183 = vmatprep.mubr.f32.mxu0 0.0
    %184 = vmatmul.mubr.f32.gmra.mrb[0].mxu0 %v47
    %v185 = vpop.f32.mrb[0].mxu0
    %v186 = vadd.f32 0.0, %v185
    %v187 = vpop.f32.mrb[0].mxu0
    %188 = vmatprep.mubr.f32.mxu0 0.0
    %189 = vmatmul.mubr.f32.gmra.mrb[0].mxu0 %v48
    %v190 = vpop.f32.mrb[0].mxu0
    %v191 = vadd.f32 0.0, %v190
    %v192 = vpop.f32.mrb[0].mxu0
    %193 = vmatprep.mubr.f32.mxu0 0.0
    %194 = vmatmul.mubr.f32.gmra.mrb[0].mxu0 %v49
    %v195 = vpop.f32.mrb[0].mxu0
    %v196 = vadd.f32 0.0, %v195
    %v197 = vpop.f32.mrb[0].mxu0
    %198 = vmatprep.mubr.f32.mxu0 0.0
    %199 = vmatmul.mubr.f32.gmra.mrb[0].mxu0 %v50
    %v200 = vpop.f32.mrb[0].mxu0
    %v201 = vadd.f32 0.0, %v200
    %v202 = vpop.f32.mrb[0].mxu0
    %203 = vmatprep.mubr.f32.mxu0 0.0
    %204 = vmatmul.mubr.f32.gmra.mrb[0].mxu0 %v51
    %v205 = vpop.f32.mrb[0].mxu0
    %v206 = vadd.f32 0.0, %v205
    %v207 = vpop.f32.mrb[0].mxu0
    %208 = vmatprep.mubr.f32.mxu0 0.0
    %209 = vmatmul.mubr.f32.gmra.mrb[0].mxu0 %v52
    %v210 = vpop.f32.mrb[0].mxu0
    %v211 = vadd.f32 0.0, %v210
    %v212 = vpop.f32.mrb[0].mxu0
    %213 = vdwg.mxu0
    %v214 = vld [vmem:[#allocation2] sm:$0xff]
    %v215 = vld [vmem:[#allocation2 + $0x8] sm:$0xff]
    %v216 = vld [vmem:[#allocation2 + $0x10] sm:$0xff]
    %v217 = vld [vmem:[#allocation2 + $0x18] sm:$0xff]
    %v218 = vld [vmem:[#allocation2 + $0x20] sm:$0xff]
    %v219 = vld [vmem:[#allocation2 + $0x28] sm:$0xff]
    %v220 = vld [vmem:[#allocation2 + $0x30] sm:$0xff]
    %v221 = vld [vmem:[#allocation2 + $0x38] sm:$0xff]
    %v222 = vld [vmem:[#allocation2 + $0x40] sm:$0xff]
    %v223 = vld [vmem:[#allocation2 + $0x48] sm:$0xff]
    %v224 = vld [vmem:[#allocation2 + $0x50] sm:$0xff]
    %v225 = vld [vmem:[#allocation2 + $0x58] sm:$0xff]
    %v226 = vld [vmem:[#allocation2 + $0x60] sm:$0xff]
    %v227 = vld [vmem:[#allocation2 + $0x68] sm:$0xff]
    %v228 = vld [vmem:[#allocation2 + $0x70] sm:$0xff]
    %v229 = vld [vmem:[#allocation2 + $0x78] sm:$0xff]
    %v230 = vld [vmem:[%s3] sm:$0x1]
    %v232 = vlaneseq
    %v233 = vshrl.u32 %v232, 7
    %v234 = vsub.s32 0, %v233
    %v235 = vrot.slane %v230, %v234
    %237 = vmatprep.subr.mxu0 0.0
    %238 = vmatpush1.msra.mxu0 %v136
    %239 = vmatprep.subr.mxu0 0.0
    %240 = vmatpush1.msra.mxu0 %v141
    %241 = vmatprep.subr.mxu0 0.0
    %242 = vmatpush1.msra.mxu0 %v146
    %243 = vmatprep.subr.mxu0 0.0
    %244 = vmatpush1.msra.mxu0 %v151
    %245 = vmatprep.subr.mxu0 0.0
    %246 = vmatpush1.msra.mxu0 %v156
    %247 = vmatprep.subr.mxu0 0.0
    %248 = vmatpush1.msra.mxu0 %v161
    %249 = vmatprep.subr.mxu0 0.0
    %250 = vmatpush1.msra.mxu0 %v166
    %251 = vmatprep.subr.mxu0 0.0
    %252 = vmatpush1.msra.mxu0 %v171
    %253 = vmatprep.subr.mxu0 0.0
    %254 = vmatpush1.msra.mxu0 %v176
    %255 = vmatprep.subr.mxu0 0.0
    %256 = vmatpush1.msra.mxu0 %v181
    %257 = vmatprep.subr.mxu0 0.0
    %258 = vmatpush1.msra.mxu0 %v186
    %259 = vmatprep.subr.mxu0 0.0
    %260 = vmatpush1.msra.mxu0 %v191
    %261 = vmatprep.subr.mxu0 0.0
    %262 = vmatpush1.msra.mxu0 %v196
    %263 = vmatprep.subr.mxu0 0.0
    %264 = vmatpush1.msra.mxu0 %v201
    %265 = vmatprep.subr.mxu0 0.0
    %266 = vmatpush1.msra.mxu0 %v206
    %267 = vmatprep.subr.mxu0 0.0
    %268 = vmatpush1.msra.mxu0 %v211
    %269 = vmatprep.subr.mxu0 0.0
    %270 = vmatpush1.msra.mxu0 0.0
    %271 = vmatprep.subr.mxu0 0.0
    %272 = vmatpush1.msra.mxu0 0.0
    %273 = vmatprep.subr.mxu0 0.0
    %274 = vmatpush1.msra.mxu0 0.0
    %275 = vmatprep.subr.mxu0 0.0
    %276 = vmatpush1.msra.mxu0 0.0
    %277 = vmatprep.subr.mxu0 0.0
    %278 = vmatpush1.msra.mxu0 0.0
    %279 = vmatprep.subr.mxu0 0.0
    %280 = vmatpush1.msra.mxu0 0.0
    %281 = vmatprep.subr.mxu0 0.0
    %282 = vmatpush1.msra.mxu0 0.0
    %283 = vmatprep.subr.mxu0 0.0
    %284 = vmatpush1.msra.mxu0 0.0
    %285 = vmatprep.subr.mxu0 0.0
    %286 = vmatpush1.msra.mxu0 0.0
    %287 = vmatprep.subr.mxu0 0.0
    %288 = vmatpush1.msra.mxu0 0.0
    %289 = vmatprep.subr.mxu0 0.0
    %290 = vmatpush1.msra.mxu0 0.0
    %291 = vmatprep.subr.mxu0 0.0
    %292 = vmatpush1.msra.mxu0 0.0
    %293 = vmatprep.subr.mxu0 0.0
    %294 = vmatpush1.msra.mxu0 0.0
    %295 = vmatprep.subr.mxu0 0.0
    %296 = vmatpush1.msra.mxu0 0.0
    %297 = vmatprep.subr.mxu0 0.0
    %298 = vmatpush1.msra.mxu0 0.0
    %299 = vmatprep.subr.mxu0 0.0
    %300 = vmatpush1.msra.mxu0 0.0
    %301 = vmatprep.mubr.f32.mxu0 0.0
    %302 = vmatmul.mubr.f32.gmra.mrb[0].mxu0 %v214
    %v303 = vpop.f32.mrb[0].mxu0
    %v304 = vadd.f32 %v235, %v303
    %v305 = vpop.f32.mrb[0].mxu0
    %306 = vmatprep.mubr.f32.mxu0 0.0
    %307 = vmatmul.mubr.f32.gmra.mrb[0].mxu0 %v215
    %v308 = vpop.f32.mrb[0].mxu0
    %v309 = vadd.f32 %v235, %v308
    %v310 = vpop.f32.mrb[0].mxu0
    %311 = vmatprep.mubr.f32.mxu0 0.0
    %312 = vmatmul.mubr.f32.gmra.mrb[0].mxu0 %v216
    %v313 = vpop.f32.mrb[0].mxu0
    %v314 = vadd.f32 %v235, %v313
    %v315 = vpop.f32.mrb[0].mxu0
    %316 = vmatprep.mubr.f32.mxu0 0.0
    %317 = vmatmul.mubr.f32.gmra.mrb[0].mxu0 %v217
    %v318 = vpop.f32.mrb[0].mxu0
    %v319 = vadd.f32 %v235, %v318
    %v320 = vpop.f32.mrb[0].mxu0
    %321 = vmatprep.mubr.f32.mxu0 0.0
    %322 = vmatmul.mubr.f32.gmra.mrb[0].mxu0 %v218
    %v323 = vpop.f32.mrb[0].mxu0
    %v324 = vadd.f32 %v235, %v323
    %v325 = vpop.f32.mrb[0].mxu0
    %326 = vmatprep.mubr.f32.mxu0 0.0
    %327 = vmatmul.mubr.f32.gmra.mrb[0].mxu0 %v219
    %v328 = vpop.f32.mrb[0].mxu0
    %v329 = vadd.f32 %v235, %v328
    %v330 = vpop.f32.mrb[0].mxu0
    %331 = vmatprep.mubr.f32.mxu0 0.0
    %332 = vmatmul.mubr.f32.gmra.mrb[0].mxu0 %v220
    %v333 = vpop.f32.mrb[0].mxu0
    %v334 = vadd.f32 %v235, %v333
    %v335 = vpop.f32.mrb[0].mxu0
    %336 = vmatprep.mubr.f32.mxu0 0.0
    %337 = vmatmul.mubr.f32.gmra.mrb[0].mxu0 %v221
    %v338 = vpop.f32.mrb[0].mxu0
    %v339 = vadd.f32 %v235, %v338
    %v340 = vpop.f32.mrb[0].mxu0
    %341 = vmatprep.mubr.f32.mxu0 0.0
    %342 = vmatmul.mubr.f32.gmra.mrb[0].mxu0 %v222
    %v343 = vpop.f32.mrb[0].mxu0
    %v344 = vadd.f32 %v235, %v343
    %v345 = vpop.f32.mrb[0].mxu0
    %346 = vmatprep.mubr.f32.mxu0 0.0
    %347 = vmatmul.mubr.f32.gmra.mrb[0].mxu0 %v223
    %v348 = vpop.f32.mrb[0].mxu0
    %v349 = vadd.f32 %v235, %v348
    %v350 = vpop.f32.mrb[0].mxu0
    %351 = vmatprep.mubr.f32.mxu0 0.0
    %352 = vmatmul.mubr.f32.gmra.mrb[0].mxu0 %v224
    %v353 = vpop.f32.mrb[0].mxu0
    %v354 = vadd.f32 %v235, %v353
    %v355 = vpop.f32.mrb[0].mxu0
    %356 = vmatprep.mubr.f32.mxu0 0.0
    %357 = vmatmul.mubr.f32.gmra.mrb[0].mxu0 %v225
    %v358 = vpop.f32.mrb[0].mxu0
    %v359 = vadd.f32 %v235, %v358
    %v360 = vpop.f32.mrb[0].mxu0
    %361 = vmatprep.mubr.f32.mxu0 0.0
    %362 = vmatmul.mubr.f32.gmra.mrb[0].mxu0 %v226
    %v363 = vpop.f32.mrb[0].mxu0
    %v364 = vadd.f32 %v235, %v363
    %v365 = vpop.f32.mrb[0].mxu0
    %366 = vmatprep.mubr.f32.mxu0 0.0
    %367 = vmatmul.mubr.f32.gmra.mrb[0].mxu0 %v227
    %v368 = vpop.f32.mrb[0].mxu0
    %v369 = vadd.f32 %v235, %v368
    %v370 = vpop.f32.mrb[0].mxu0
    %371 = vmatprep.mubr.f32.mxu0 0.0
    %372 = vmatmul.mubr.f32.gmra.mrb[0].mxu0 %v228
    %v373 = vpop.f32.mrb[0].mxu0
    %v374 = vadd.f32 %v235, %v373
    %v375 = vpop.f32.mrb[0].mxu0
    %376 = vmatprep.mubr.f32.mxu0 0.0
    %377 = vmatmul.mubr.f32.gmra.mrb[0].mxu0 %v229
    %v378 = vpop.f32.mrb[0].mxu0
    %v379 = vadd.f32 %v235, %v378
    %v380 = vpop.f32.mrb[0].mxu0
    %381 = vdwg.mxu0
    %v382 = vmax.f32 %v304, 0.0
    %v383 = vmax.f32 %v309, 0.0
    %v384 = vmax.f32 %v314, 0.0
    %v385 = vmax.f32 %v319, 0.0
    %v386 = vmax.f32 %v324, 0.0
    %v387 = vmax.f32 %v329, 0.0
    %v388 = vmax.f32 %v334, 0.0
    %v389 = vmax.f32 %v339, 0.0
    %v390 = vmax.f32 %v344, 0.0
    %v391 = vmax.f32 %v349, 0.0
    %v392 = vmax.f32 %v354, 0.0
    %v393 = vmax.f32 %v359, 0.0
    %v394 = vmax.f32 %v364, 0.0
    %v395 = vmax.f32 %v369, 0.0
    %v396 = vmax.f32 %v374, 0.0
    %v397 = vmax.f32 %v379, 0.0
    %v398 = vld [vmem:[%s4] sm:$0xff]
    %v399 = vld [vmem:[%s4 + $0x8] sm:$0xff]
    %v400 = vld [vmem:[%s4 + $0x10] sm:$0xff]
    %v401 = vld [vmem:[%s4 + $0x18] sm:$0xff]
    %v402 = vld [vmem:[%s4 + $0x20] sm:$0xff]
    %v403 = vld [vmem:[%s4 + $0x28] sm:$0xff]
    %v404 = vld [vmem:[%s4 + $0x30] sm:$0xff]
    %v405 = vld [vmem:[%s4 + $0x38] sm:$0xff]
    %v406 = vld [vmem:[%s4 + $0x40] sm:$0xff]
    %v407 = vld [vmem:[%s4 + $0x48] sm:$0xff]
    %v408 = vld [vmem:[%s4 + $0x50] sm:$0xff]
    %v409 = vld [vmem:[%s4 + $0x58] sm:$0xff]
    %v410 = vld [vmem:[%s4 + $0x60] sm:$0xff]
    %v411 = vld [vmem:[%s4 + $0x68] sm:$0xff]
    %v412 = vld [vmem:[%s4 + $0x70] sm:$0xff]
    %v413 = vld [vmem:[%s4 + $0x78] sm:$0xff]
    %414 = vmatprep.subr.mxu0 0.0
    %415 = vmatpush1.msra.mxu0 %v398
    %416 = vmatprep.subr.mxu0 0.0
    %417 = vmatpush1.msra.mxu0 %v399
    %418 = vmatprep.subr.mxu0 0.0
    %419 = vmatpush1.msra.mxu0 %v400
    %420 = vmatprep.subr.mxu0 0.0
    %421 = vmatpush1.msra.mxu0 %v401
    %422 = vmatprep.subr.mxu0 0.0
    %423 = vmatpush1.msra.mxu0 %v402
    %424 = vmatprep.subr.mxu0 0.0
    %425 = vmatpush1.msra.mxu0 %v403
    %426 = vmatprep.subr.mxu0 0.0
    %427 = vmatpush1.msra.mxu0 %v404
    %428 = vmatprep.subr.mxu0 0.0
    %429 = vmatpush1.msra.mxu0 %v405
    %430 = vmatprep.subr.mxu0 0.0
    %431 = vmatpush1.msra.mxu0 %v406
    %432 = vmatprep.subr.mxu0 0.0
    %433 = vmatpush1.msra.mxu0 %v407
    %434 = vmatprep.subr.mxu0 0.0
    %435 = vmatpush1.msra.mxu0 %v408
    %436 = vmatprep.subr.mxu0 0.0
    %437 = vmatpush1.msra.mxu0 %v409
    %438 = vmatprep.subr.mxu0 0.0
    %439 = vmatpush1.msra.mxu0 %v410
    %440 = vmatprep.subr.mxu0 0.0
    %441 = vmatpush1.msra.mxu0 %v411
    %442 = vmatprep.subr.mxu0 0.0
    %443 = vmatpush1.msra.mxu0 %v412
    %444 = vmatprep.subr.mxu0 0.0
    %445 = vmatpush1.msra.mxu0 %v413
    %446 = vmatprep.subr.mxu0 0.0
    %447 = vmatpush1.msra.mxu0 0.0
    %448 = vmatprep.subr.mxu0 0.0
    %449 = vmatpush1.msra.mxu0 0.0
    %450 = vmatprep.subr.mxu0 0.0
    %451 = vmatpush1.msra.mxu0 0.0
    %452 = vmatprep.subr.mxu0 0.0
    %453 = vmatpush1.msra.mxu0 0.0
    %454 = vmatprep.subr.mxu0 0.0
    %455 = vmatpush1.msra.mxu0 0.0
    %456 = vmatprep.subr.mxu0 0.0
    %457 = vmatpush1.msra.mxu0 0.0
    %458 = vmatprep.subr.mxu0 0.0
    %459 = vmatpush1.msra.mxu0 0.0
    %460 = vmatprep.subr.mxu0 0.0
    %461 = vmatpush1.msra.mxu0 0.0
    %462 = vmatprep.subr.mxu0 0.0
    %463 = vmatpush1.msra.mxu0 0.0
    %464 = vmatprep.subr.mxu0 0.0
    %465 = vmatpush1.msra.mxu0 0.0
    %466 = vmatprep.subr.mxu0 0.0
    %467 = vmatpush1.msra.mxu0 0.0
    %468 = vmatprep.subr.mxu0 0.0
    %469 = vmatpush1.msra.mxu0 0.0
    %470 = vmatprep.subr.mxu0 0.0
    %471 = vmatpush1.msra.mxu0 0.0
    %472 = vmatprep.subr.mxu0 0.0
    %473 = vmatpush1.msra.mxu0 0.0
    %474 = vmatprep.subr.mxu0 0.0
    %475 = vmatpush1.msra.mxu0 0.0
    %476 = vmatprep.subr.mxu0 0.0
    %477 = vmatpush1.msra.mxu0 0.0
    %478 = vmatprep.mubr.f32.mxu0 0.0
    %479 = vmatmul.mubr.f32.gmra.mrb[0].mxu0 %v382
    %v480 = vpop.f32.mrb[0].mxu0
    %v481 = vadd.f32 0.0, %v480
    %v482 = vpop.f32.mrb[0].mxu0
    %483 = vmatprep.mubr.f32.mxu0 0.0
    %484 = vmatmul.mubr.f32.gmra.mrb[0].mxu0 %v383
    %v485 = vpop.f32.mrb[0].mxu0
    %v486 = vadd.f32 0.0, %v485
    %v487 = vpop.f32.mrb[0].mxu0
    %488 = vmatprep.mubr.f32.mxu0 0.0
    %489 = vmatmul.mubr.f32.gmra.mrb[0].mxu0 %v384
    %v490 = vpop.f32.mrb[0].mxu0
    %v491 = vadd.f32 0.0, %v490
    %v492 = vpop.f32.mrb[0].mxu0
    %493 = vmatprep.mubr.f32.mxu0 0.0
    %494 = vmatmul.mubr.f32.gmra.mrb[0].mxu0 %v385
    %v495 = vpop.f32.mrb[0].mxu0
    %v496 = vadd.f32 0.0, %v495
    %v497 = vpop.f32.mrb[0].mxu0
    %498 = vmatprep.mubr.f32.mxu0 0.0
    %499 = vmatmul.mubr.f32.gmra.mrb[0].mxu0 %v386
    %v500 = vpop.f32.mrb[0].mxu0
    %v501 = vadd.f32 0.0, %v500
    %v502 = vpop.f32.mrb[0].mxu0
    %503 = vmatprep.mubr.f32.mxu0 0.0
    %504 = vmatmul.mubr.f32.gmra.mrb[0].mxu0 %v387
    %v505 = vpop.f32.mrb[0].mxu0
    %v506 = vadd.f32 0.0, %v505
    %v507 = vpop.f32.mrb[0].mxu0
    %508 = vmatprep.mubr.f32.mxu0 0.0
    %509 = vmatmul.mubr.f32.gmra.mrb[0].mxu0 %v388
    %v510 = vpop.f32.mrb[0].mxu0
    %v511 = vadd.f32 0.0, %v510
    %v512 = vpop.f32.mrb[0].mxu0
    %513 = vmatprep.mubr.f32.mxu0 0.0
    %514 = vmatmul.mubr.f32.gmra.mrb[0].mxu0 %v389
    %v515 = vpop.f32.mrb[0].mxu0
    %v516 = vadd.f32 0.0, %v515
    %v517 = vpop.f32.mrb[0].mxu0
    %518 = vmatprep.mubr.f32.mxu0 0.0
    %519 = vmatmul.mubr.f32.gmra.mrb[0].mxu0 %v390
    %v520 = vpop.f32.mrb[0].mxu0
    %v521 = vadd.f32 0.0, %v520
    %v522 = vpop.f32.mrb[0].mxu0
    %523 = vmatprep.mubr.f32.mxu0 0.0
    %524 = vmatmul.mubr.f32.gmra.mrb[0].mxu0 %v391
    %v525 = vpop.f32.mrb[0].mxu0
    %v526 = vadd.f32 0.0, %v525
    %v527 = vpop.f32.mrb[0].mxu0
    %528 = vmatprep.mubr.f32.mxu0 0.0
    %529 = vmatmul.mubr.f32.gmra.mrb[0].mxu0 %v392
    %v530 = vpop.f32.mrb[0].mxu0
    %v531 = vadd.f32 0.0, %v530
    %v532 = vpop.f32.mrb[0].mxu0
    %533 = vmatprep.mubr.f32.mxu0 0.0
    %534 = vmatmul.mubr.f32.gmra.mrb[0].mxu0 %v393
    %v535 = vpop.f32.mrb[0].mxu0
    %v536 = vadd.f32 0.0, %v535
    %v537 = vpop.f32.mrb[0].mxu0
    %538 = vmatprep.mubr.f32.mxu0 0.0
    %539 = vmatmul.mubr.f32.gmra.mrb[0].mxu0 %v394
    %v540 = vpop.f32.mrb[0].mxu0
    %v541 = vadd.f32 0.0, %v540
    %v542 = vpop.f32.mrb[0].mxu0
    %543 = vmatprep.mubr.f32.mxu0 0.0
    %544 = vmatmul.mubr.f32.gmra.mrb[0].mxu0 %v395
    %v545 = vpop.f32.mrb[0].mxu0
    %v546 = vadd.f32 0.0, %v545
    %v547 = vpop.f32.mrb[0].mxu0
    %548 = vmatprep.mubr.f32.mxu0 0.0
    %549 = vmatmul.mubr.f32.gmra.mrb[0].mxu0 %v396
    %v550 = vpop.f32.mrb[0].mxu0
    %v551 = vadd.f32 0.0, %v550
    %v552 = vpop.f32.mrb[0].mxu0
    %553 = vmatprep.mubr.f32.mxu0 0.0
    %554 = vmatmul.mubr.f32.gmra.mrb[0].mxu0 %v397
    %v555 = vpop.f32.mrb[0].mxu0
    %v556 = vadd.f32 0.0, %v555
    %v557 = vpop.f32.mrb[0].mxu0
    %558 = vdwg.mxu0
    %v559 = vld [vmem:[%s5] sm:$0x1]
    %v561 = vlaneseq
    %v562 = vshrl.u32 %v561, 7
    %v563 = vsub.s32 0, %v562
    %v564 = vrot.slane %v559, %v563
    %566 = vmatprep.subr.mxu0 0.0
    %567 = vmatpush1.msra.mxu0 %v481
    %568 = vmatprep.subr.mxu0 0.0
    %569 = vmatpush1.msra.mxu0 %v486
    %570 = vmatprep.subr.mxu0 0.0
    %571 = vmatpush1.msra.mxu0 %v491
    %572 = vmatprep.subr.mxu0 0.0
    %573 = vmatpush1.msra.mxu0 %v496
    %574 = vmatprep.subr.mxu0 0.0
    %575 = vmatpush1.msra.mxu0 %v501
    %576 = vmatprep.subr.mxu0 0.0
    %577 = vmatpush1.msra.mxu0 %v506
    %578 = vmatprep.subr.mxu0 0.0
    %579 = vmatpush1.msra.mxu0 %v511
    %580 = vmatprep.subr.mxu0 0.0
    %581 = vmatpush1.msra.mxu0 %v516
    %582 = vmatprep.subr.mxu0 0.0
    %583 = vmatpush1.msra.mxu0 %v521
    %584 = vmatprep.subr.mxu0 0.0
    %585 = vmatpush1.msra.mxu0 %v526
    %586 = vmatprep.subr.mxu0 0.0
    %587 = vmatpush1.msra.mxu0 %v531
    %588 = vmatprep.subr.mxu0 0.0
    %589 = vmatpush1.msra.mxu0 %v536
    %590 = vmatprep.subr.mxu0 0.0
    %591 = vmatpush1.msra.mxu0 %v541
    %592 = vmatprep.subr.mxu0 0.0
    %593 = vmatpush1.msra.mxu0 %v546
    %594 = vmatprep.subr.mxu0 0.0
    %595 = vmatpush1.msra.mxu0 %v551
    %596 = vmatprep.subr.mxu0 0.0
    %597 = vmatpush1.msra.mxu0 %v556
    %598 = vmatprep.subr.mxu0 0.0
    %599 = vmatpush1.msra.mxu0 0.0
    %600 = vmatprep.subr.mxu0 0.0
    %601 = vmatpush1.msra.mxu0 0.0
    %602 = vmatprep.subr.mxu0 0.0
    %603 = vmatpush1.msra.mxu0 0.0
    %604 = vmatprep.subr.mxu0 0.0
    %605 = vmatpush1.msra.mxu0 0.0
    %606 = vmatprep.subr.mxu0 0.0
    %607 = vmatpush1.msra.mxu0 0.0
    %608 = vmatprep.subr.mxu0 0.0
    %609 = vmatpush1.msra.mxu0 0.0
    %610 = vmatprep.subr.mxu0 0.0
    %611 = vmatpush1.msra.mxu0 0.0
    %612 = vmatprep.subr.mxu0 0.0
    %613 = vmatpush1.msra.mxu0 0.0
    %614 = vmatprep.subr.mxu0 0.0
    %615 = vmatpush1.msra.mxu0 0.0
    %616 = vmatprep.subr.mxu0 0.0
    %617 = vmatpush1.msra.mxu0 0.0
    %618 = vmatprep.subr.mxu0 0.0
    %619 = vmatpush1.msra.mxu0 0.0
    %620 = vmatprep.subr.mxu0 0.0
    %621 = vmatpush1.msra.mxu0 0.0
    %622 = vmatprep.subr.mxu0 0.0
    %623 = vmatpush1.msra.mxu0 0.0
    %624 = vmatprep.subr.mxu0 0.0
    %625 = vmatpush1.msra.mxu0 0.0
    %626 = vmatprep.subr.mxu0 0.0
    %627 = vmatpush1.msra.mxu0 0.0
    %628 = vmatprep.subr.mxu0 0.0
    %629 = vmatpush1.msra.mxu0 0.0
    %630 = vmatprep.mubr.f32.mxu0 0.0
    %631 = vmatmul.mubr.f32.gmra.mrb[0].mxu0 %v214
    %v632 = vpop.f32.mrb[0].mxu0
    %v633 = vadd.f32 %v564, %v632
    %v634 = vpop.f32.mrb[0].mxu0
    %635 = vmatprep.mubr.f32.mxu0 0.0
    %636 = vmatmul.mubr.f32.gmra.mrb[0].mxu0 %v215
    %v637 = vpop.f32.mrb[0].mxu0
    %v638 = vadd.f32 %v564, %v637
    %v639 = vpop.f32.mrb[0].mxu0
    %640 = vmatprep.mubr.f32.mxu0 0.0
    %641 = vmatmul.mubr.f32.gmra.mrb[0].mxu0 %v216
    %v642 = vpop.f32.mrb[0].mxu0
    %v643 = vadd.f32 %v564, %v642
    %v644 = vpop.f32.mrb[0].mxu0
    %645 = vmatprep.mubr.f32.mxu0 0.0
    %646 = vmatmul.mubr.f32.gmra.mrb[0].mxu0 %v217
    %v647 = vpop.f32.mrb[0].mxu0
    %v648 = vadd.f32 %v564, %v647
    %v649 = vpop.f32.mrb[0].mxu0
    %650 = vmatprep.mubr.f32.mxu0 0.0
    %651 = vmatmul.mubr.f32.gmra.mrb[0].mxu0 %v218
    %v652 = vpop.f32.mrb[0].mxu0
    %v653 = vadd.f32 %v564, %v652
    %v654 = vpop.f32.mrb[0].mxu0
    %655 = vmatprep.mubr.f32.mxu0 0.0
    %656 = vmatmul.mubr.f32.gmra.mrb[0].mxu0 %v219
    %v657 = vpop.f32.mrb[0].mxu0
    %v658 = vadd.f32 %v564, %v657
    %v659 = vpop.f32.mrb[0].mxu0
    %660 = vmatprep.mubr.f32.mxu0 0.0
    %661 = vmatmul.mubr.f32.gmra.mrb[0].mxu0 %v220
    %v662 = vpop.f32.mrb[0].mxu0
    %v663 = vadd.f32 %v564, %v662
    %v664 = vpop.f32.mrb[0].mxu0
    %665 = vmatprep.mubr.f32.mxu0 0.0
    %666 = vmatmul.mubr.f32.gmra.mrb[0].mxu0 %v221
    %v667 = vpop.f32.mrb[0].mxu0
    %v668 = vadd.f32 %v564, %v667
    %v669 = vpop.f32.mrb[0].mxu0
    %670 = vmatprep.mubr.f32.mxu0 0.0
    %671 = vmatmul.mubr.f32.gmra.mrb[0].mxu0 %v222
    %v672 = vpop.f32.mrb[0].mxu0
    %v673 = vadd.f32 %v564, %v672
    %v674 = vpop.f32.mrb[0].mxu0
    %675 = vmatprep.mubr.f32.mxu0 0.0
    %676 = vmatmul.mubr.f32.gmra.mrb[0].mxu0 %v223
    %v677 = vpop.f32.mrb[0].mxu0
    %v678 = vadd.f32 %v564, %v677
    %v679 = vpop.f32.mrb[0].mxu0
    %680 = vmatprep.mubr.f32.mxu0 0.0
    %681 = vmatmul.mubr.f32.gmra.mrb[0].mxu0 %v224
    %v682 = vpop.f32.mrb[0].mxu0
    %v683 = vadd.f32 %v564, %v682
    %v684 = vpop.f32.mrb[0].mxu0
    %685 = vmatprep.mubr.f32.mxu0 0.0
    %686 = vmatmul.mubr.f32.gmra.mrb[0].mxu0 %v225
    %v687 = vpop.f32.mrb[0].mxu0
    %v688 = vadd.f32 %v564, %v687
    %v689 = vpop.f32.mrb[0].mxu0
    %690 = vmatprep.mubr.f32.mxu0 0.0
    %691 = vmatmul.mubr.f32.gmra.mrb[0].mxu0 %v226
    %v692 = vpop.f32.mrb[0].mxu0
    %v693 = vadd.f32 %v564, %v692
    %v694 = vpop.f32.mrb[0].mxu0
    %695 = vmatprep.mubr.f32.mxu0 0.0
    %696 = vmatmul.mubr.f32.gmra.mrb[0].mxu0 %v227
    %v697 = vpop.f32.mrb[0].mxu0
    %v698 = vadd.f32 %v564, %v697
    %v699 = vpop.f32.mrb[0].mxu0
    %700 = vmatprep.mubr.f32.mxu0 0.0
    %701 = vmatmul.mubr.f32.gmra.mrb[0].mxu0 %v228
    %v702 = vpop.f32.mrb[0].mxu0
    %v703 = vadd.f32 %v564, %v702
    %v704 = vpop.f32.mrb[0].mxu0
    %705 = vmatprep.mubr.f32.mxu0 0.0
    %706 = vmatmul.mubr.f32.gmra.mrb[0].mxu0 %v229
    %v707 = vpop.f32.mrb[0].mxu0
    %v708 = vadd.f32 %v564, %v707
    %v709 = vpop.f32.mrb[0].mxu0
    %710 = vdwg.mxu0
    %v711 = vmax.f32 %v633, 0.0
    %v712 = vmax.f32 %v638, 0.0
    %v713 = vmax.f32 %v643, 0.0
    %v714 = vmax.f32 %v648, 0.0
    %v715 = vmax.f32 %v653, 0.0
    %v716 = vmax.f32 %v658, 0.0
    %v717 = vmax.f32 %v663, 0.0
    %v718 = vmax.f32 %v668, 0.0
    %v719 = vmax.f32 %v673, 0.0
    %v720 = vmax.f32 %v678, 0.0
    %v721 = vmax.f32 %v683, 0.0
    %v722 = vmax.f32 %v688, 0.0
    %v723 = vmax.f32 %v693, 0.0
    %v724 = vmax.f32 %v698, 0.0
    %v725 = vmax.f32 %v703, 0.0
    %v726 = vmax.f32 %v708, 0.0
    %727 = vst [vmem:[%s6] sm:$0xff] %v711
    %728 = vst [vmem:[%s6 + $0x8] sm:$0xff] %v712
    %729 = vst [vmem:[%s6 + $0x10] sm:$0xff] %v713
    %730 = vst [vmem:[%s6 + $0x18] sm:$0xff] %v714
    %731 = vst [vmem:[%s6 + $0x20] sm:$0xff] %v715
    %732 = vst [vmem:[%s6 + $0x28] sm:$0xff] %v716
    %733 = vst [vmem:[%s6 + $0x30] sm:$0xff] %v717
    %734 = vst [vmem:[%s6 + $0x38] sm:$0xff] %v718
    %735 = vst [vmem:[%s6 + $0x40] sm:$0xff] %v719
    %736 = vst [vmem:[%s6 + $0x48] sm:$0xff] %v720
    %737 = vst [vmem:[%s6 + $0x50] sm:$0xff] %v721
    %738 = vst [vmem:[%s6 + $0x58] sm:$0xff] %v722
    %739 = vst [vmem:[%s6 + $0x60] sm:$0xff] %v723
    %740 = vst [vmem:[%s6 + $0x68] sm:$0xff] %v724
    %741 = vst [vmem:[%s6 + $0x70] sm:$0xff] %v725
    %742 = vst [vmem:[%s6 + $0x78] sm:$0xff] %v726
    // Predicated region
    $region30: #{forward.1} parent=1 // pred_check
      _
    $region31: #{forward.1} parent=1 // pred_check_branch
      %744 = sbr.rel (0) target = $region33
    $region32: #{forward.1} parent=1 // pred_region
      _
    $region33: #{forward.1} parent=1 // pred_fallthru
      _
    // Predicated region
    $region34: #{forward.1} parent=1 // pred_check
      _
    $region35: #{forward.1} parent=1 // pred_check_branch
      %746 = sbr.rel (0) target = $region37
    $region36: #{forward.1} parent=1 // pred_region
      _
    $region37: #{forward.1} parent=1 // pred_fallthru
      _
    %747 = vsyncpa [#allocation3], 1

</llo_original>
